<compile_context>
chip_gen: v7x
topology: tpu7x:2x2x1
jax: 0.10.0
libtpu: 0.0.40
codegen_flags: <defaults>
</compile_context>

<pallas_src>
import math

import jax
import jax.numpy as jnp
from jax.experimental import pallas as pl
from jax.experimental.pallas import tpu as pltpu


def _round_up(x, m):
    return ((x + m - 1) // m) * m


def _vip_kernel_factory(TB, T, F, L, Cp):
    """Kernel body with all loop bounds / shapes baked in statically."""
    S = 2 ** (L - 1)  # number of cosets at the finest level

    def kernel(x_ref, w_ref, b_ref, o_ref):
        # x_ref: [TB, T, F]  w_ref: [L*F, Cp]  b_ref: [1, Cp]  o_ref: [TB, Cp]
        x = x_ref[...]  # keep input dtype for the max reduction (exact)

        # Level L-1 cosets: max over all time steps t with equal (t mod S).
        c = jnp.max(x.reshape(TB, T // S, S, F), axis=1)          # [TB, S, F]

        pooled = [None] * L
        pooled[L - 1] = c.astype(jnp.float32).sum(axis=1) * (1.0 / S)

        # Coarser levels via hierarchical coset merge (halving).
        for n in range(L - 2, -1, -1):
            half = 2 ** n
            c = jnp.maximum(c[:, :half, :], c[:, half:, :])       # [TB, half, F]
            pooled[n] = c.astype(jnp.float32).sum(axis=1) * (1.0 / half)

        # Fused inference: level weights already folded into w_ref / b_ref.
        feats = jnp.concatenate(pooled, axis=-1)                  # [TB, L*F]
        logits = jnp.dot(feats, w_ref[...],
                         preferred_element_type=jnp.float32)      # [TB, Cp]
        logits = logits + b_ref[...]
        # TODO(synk): nn.Dropout is identity at inference time; not modeled.
        o_ref[...] = jax.nn.sigmoid(logits).astype(o_ref.dtype)

    return kernel


def vip_layer_forward(x, W, b, *, vip_level, weighted_addition=False,
                      block_b=256):
    """x: [B, T, F], W: [L, F, C], b: [L, C] -> [B, C] (sigmoid outputs)."""
    B, T, F = x.shape
    L, F2, C = W.shape
    assert L == vip_level and F2 == F
    lvl_limit = math.log(T, 2)
    assert int(lvl_limit) == lvl_limit, "seq_len must be a power of 2"
    assert vip_level <= lvl_limit + 1

    # ---- host-side folding: level weights + matmul fusion + lane padding ----
    level_w = jnp.array(
        [float(2 ** n) if weighted_addition else 1.0 for n in range(L)],
        dtype=jnp.float32)
    W_flat = (W.astype(jnp.float32) * level_w[:, None, None]).reshape(L * F, C)
    b_total = (level_w[:, None] * b.astype(jnp.float32)).sum(axis=0)   # [C]

    Cp = _round_up(C, 128)  # lane-dense output -> unmasked vector stores
    W_pad = jnp.zeros((L * F, Cp), jnp.float32).at[:, :C].set(W_flat)
    b_pad = jnp.zeros((1, Cp), jnp.float32).at[0, :C].set(b_total)

    # ---- batch tiling (multiple of 8 when tiled, otherwise the full batch) ----
    if B <= block_b:
        TB = B
    else:
        TB = _round_up(block_b, 8)
    grid = (pl.cdiv(B, TB),)

    kernel = _vip_kernel_factory(TB, T, F, L, Cp)

    itemsize = jnp.dtype(x.dtype).itemsize
    cost = pl.CostEstimate(
        flops=2 * B * (L * F) * Cp + 2 * B * T * F,
        transcendentals=B * Cp,
        bytes_accessed=B * T * F * itemsize + L * F * Cp * 4 + B * Cp * 4,
    )

    out_padded = pl.pallas_call(
        kernel,
        out_shape=jax.ShapeDtypeStruct((B, Cp), jnp.float32),
        grid_spec=pltpu.PrefetchScalarGridSpec(
            num_scalar_prefetch=0,
            grid=grid,
            in_specs=[
                pl.BlockSpec((TB, T, F), lambda i: (i, 0, 0)),
                pl.BlockSpec((L * F, Cp), lambda i: (0, 0)),
                pl.BlockSpec((1, Cp), lambda i: (0, 0)),
            ],
            out_specs=pl.BlockSpec((TB, Cp), lambda i: (i, 0)),
        ),
        compiler_params=pltpu.CompilerParams(
            dimension_semantics=("parallel",),
            vmem_limit_bytes=64 * 1024 * 1024),
        cost_estimate=cost,
    )(x, W_pad, b_pad)

    return out_padded[:, :C]


def vip_layer_reference(x, W, b, *, vip_level, weighted_addition=False):
    """Pure-JAX reference mirroring the PyTorch forward."""
    B, T, F = x.shape
    acc = 0.0
    for n in range(vip_level):
        stride = 2 ** n
        y = x.reshape(B, T // stride, stride, F)
        pooled = y.max(axis=1).mean(axis=1)                    # [B, F]
        wgt = float(2 ** n) if weighted_addition else 1.0
        acc = acc + wgt * (pooled @ W[n] + b[n][None, :])
    return jax.nn.sigmoid(acc)


if __name__ == "__main__":
    # Small, module-consistent shapes.
    B, seq_len, dim_feats, num_class = 2, 8, 32, 4
    VIP_level = 3

    key = jax.random.PRNGKey(0)
    kx, kw, kb = jax.random.split(key, 3)

    x = jax.random.normal(kx, (B, seq_len, dim_feats), dtype=jnp.float32)
    # Synthetic parameters for the VIP_level Linear layers, stacked as
    # [L, F, C] / [L, C] (Linear weight stored transposed).
    W = 0.05 * jax.random.normal(kw, (VIP_level, dim_feats, num_class),
                                 dtype=jnp.float32)
    b = 0.01 * jax.random.normal(kb, (VIP_level, num_class), dtype=jnp.float32)

    ok = True
    for weighted_addition in (False, True):
        out = vip_layer_forward(x, W, b, vip_level=VIP_level,
                                weighted_addition=weighted_addition)
        out = jax.block_until_ready(out)
        ref = vip_layer_reference(x, W, b, vip_level=VIP_level,
                                  weighted_addition=weighted_addition)
        ok = ok and out.shape == (B, num_class)
        ok = ok and bool(jnp.allclose(out, ref, atol=1e-5, rtol=1e-5))

    assert ok
    print("KERNEL_OK")
</pallas_src>

<mosaic_0001>
module attributes {stable_mosaic.version = 11 : i64} {
  func.func @kernel(%arg0: i32, %arg1: memref<2x8x32xf32, #tpu.memory_space<vmem>>, %arg2: memref<96x128xf32, #tpu.memory_space<vmem>>, %arg3: memref<1x128xf32, #tpu.memory_space<vmem>>, %arg4: memref<2x128xf32, #tpu.memory_space<vmem>>) attributes {dimension_semantics = [#tpu.dimension_semantics<parallel>], iteration_bounds = array<i64: 1>, scalar_prefetch = 0 : i64, scratch_operands = 0 : i64, tpu.core_type = #tpu.core_type<tc>, window_params = [{transform_indices = @transform_0, window_bounds = array<i64: 2, 8, 32>}, {pipeline_mode = #tpu.pipeline_mode<synchronous>, transform_indices = @transform_1, window_bounds = array<i64: 96, 128>}, {pipeline_mode = #tpu.pipeline_mode<synchronous>, transform_indices = @transform_2, window_bounds = array<i64: 1, 128>}, {transform_indices = @transform_3, window_bounds = array<i64: 2, 128>}]} {
    %c0 = arith.constant 0 : index
    %c0_0 = arith.constant 0 : index
    %c0_1 = arith.constant 0 : index
    %0 = vector.load %arg1[%c0, %c0_0, %c0_1] : memref<2x8x32xf32, #tpu.memory_space<vmem>>, vector<2x8x32xf32>
    %1 = vector.shape_cast %0 : vector<2x8x32xf32> to vector<2x2x4x32xf32>
    %cst = arith.constant dense<0xFF800000> : vector<2x4x32xf32>
    %2 = vector.multi_reduction <maximumf>, %1, %cst [1] : vector<2x2x4x32xf32> to vector<2x4x32xf32>
    %cst_2 = arith.constant dense<0.000000e+00> : vector<2x32xf32>
    %3 = vector.multi_reduction <add>, %2, %cst_2 [1] : vector<2x4x32xf32> to vector<2x32xf32>
    %cst_3 = arith.constant 2.500000e-01 : f32
    %4 = vector.broadcast %cst_3 : f32 to vector<2x32xf32>
    %5 = arith.mulf %3, %4 : vector<2x32xf32>
    %6 = vector.extract_strided_slice %2 {offsets = [0, 0, 0], sizes = [2, 2, 32], strides = [1, 1, 1]} : vector<2x4x32xf32> to vector<2x2x32xf32>
    %7 = vector.extract_strided_slice %2 {offsets = [0, 2, 0], sizes = [2, 2, 32], strides = [1, 1, 1]} : vector<2x4x32xf32> to vector<2x2x32xf32>
    %8 = arith.maximumf %6, %7 : vector<2x2x32xf32>
    %cst_4 = arith.constant dense<0.000000e+00> : vector<2x32xf32>
    %9 = vector.multi_reduction <add>, %8, %cst_4 [1] : vector<2x2x32xf32> to vector<2x32xf32>
    %cst_5 = arith.constant 5.000000e-01 : f32
    %10 = vector.broadcast %cst_5 : f32 to vector<2x32xf32>
    %11 = arith.mulf %9, %10 : vector<2x32xf32>
    %12 = vector.extract_strided_slice %8 {offsets = [0, 0, 0], sizes = [2, 1, 32], strides = [1, 1, 1]} : vector<2x2x32xf32> to vector<2x1x32xf32>
    %13 = vector.extract_strided_slice %8 {offsets = [0, 1, 0], sizes = [2, 1, 32], strides = [1, 1, 1]} : vector<2x2x32xf32> to vector<2x1x32xf32>
    %14 = arith.maximumf %12, %13 : vector<2x1x32xf32>
    %cst_6 = arith.constant dense<0.000000e+00> : vector<2x32xf32>
    %15 = vector.multi_reduction <add>, %14, %cst_6 [1] : vector<2x1x32xf32> to vector<2x32xf32>
    %cst_7 = arith.constant 1.000000e+00 : f32
    %16 = vector.broadcast %cst_7 : f32 to vector<2x32xf32>
    %17 = arith.mulf %15, %16 : vector<2x32xf32>
    %18 = tpu.concatenate %17, %11, %5 in 1 : vector<2x32xf32>, vector<2x32xf32>, vector<2x32xf32> -> vector<2x96xf32>
    %c0_8 = arith.constant 0 : index
    %c0_9 = arith.constant 0 : index
    %19 = vector.load %arg2[%c0_8, %c0_9] : memref<96x128xf32, #tpu.memory_space<vmem>>, vector<96x128xf32>
    %cst_10 = arith.constant dense<0.000000e+00> : vector<2x128xf32>
    %20 = tpu.matmul %18, %19, %cst_10 {dimension_numbers = #tpu.dot_dimension_numbers<[1], [0], [0], [1], [0, 0, 1, 1], [], []>} : vector<2x96xf32>, vector<96x128xf32>, vector<2x128xf32> -> vector<2x128xf32>
    %c0_11 = arith.constant 0 : index
    %c0_12 = arith.constant 0 : index
    %21 = vector.load %arg3[%c0_11, %c0_12] : memref<1x128xf32, #tpu.memory_space<vmem>>, vector<1x128xf32>
    %22 = vector.broadcast %21 : vector<1x128xf32> to vector<2x128xf32>
    %23 = arith.addf %20, %22 : vector<2x128xf32>
    %24 = arith.negf %23 : vector<2x128xf32>
    %25 = math.exp %24 : vector<2x128xf32>
    %cst_13 = arith.constant 1.000000e+00 : f32
    %26 = vector.broadcast %cst_13 : f32 to vector<2x128xf32>
    %27 = arith.addf %26, %25 : vector<2x128xf32>
    %28 = arith.divf %26, %27 : vector<2x128xf32>
    %c0_14 = arith.constant 0 : index
    %c0_15 = arith.constant 0 : index
    %29 = vector.load %arg4[%c0_14, %c0_15] : memref<2x128xf32, #tpu.memory_space<vmem>>, vector<2x128xf32>
    tpu.vector_store %arg4[%c0_14, %c0_15], %28 {strides = array<i32>} : memref<2x128xf32, #tpu.memory_space<vmem>>, vector<2x128xf32>,
    return
  }
  func.func @transform_0(%arg0: i32) -> (i32, i32, i32) {
    %c0_i32 = arith.constant 0 : i32
    %c0_i32_0 = arith.constant 0 : i32
    %c0_i32_1 = arith.constant 0 : i32
    return %arg0, %c0_i32, %c0_i32_0 : i32, i32, i32
  }
  func.func @transform_1(%arg0: i32) -> (i32, i32) {
    %c0_i32 = arith.constant 0 : i32
    %c0_i32_0 = arith.constant 0 : i32
    %c0_i32_1 = arith.constant 0 : i32
    return %c0_i32, %c0_i32_0 : i32, i32
  }
  func.func @transform_2(%arg0: i32) -> (i32, i32) {
    %c0_i32 = arith.constant 0 : i32
    %c0_i32_0 = arith.constant 0 : i32
    %c0_i32_1 = arith.constant 0 : i32
    return %c0_i32, %c0_i32_0 : i32, i32
  }
  func.func @transform_3(%arg0: i32) -> (i32, i32) {
    %c0_i32 = arith.constant 0 : i32
    %c0_i32_0 = arith.constant 0 : i32
    return %arg0, %c0_i32 : i32, i32
  }
}

</mosaic_0001>

<llo_original>
// kernel: tpu_custom_call.1
$region0: #{tpu_custom_call.1}
  #allocation0 [shape = 'u32[]', space=smem, size = 0x4, offset = 0x4, fixed_abs, tag = 'smem constant byte address 0x4 - core index']
  #allocation1 [shape = 'u32[144,128]{1,0:T(1,128)}', space=vmem, size = 0x12000, scoped, tag = 'internal scratch']
  %s0 = inlined_call_operand.hbm [shape: f32[2,8,32], index: 0, kind: input, shape index: {}]
  %s1 = inlined_call_operand.hbm [shape: f32[96,128], index: 1, kind: input, shape index: {}]
  %s2 = inlined_call_operand.hbm [shape: f32[1,128], index: 2, kind: input, shape index: {}]
  %s3 = inlined_call_operand.hbm [shape: f32[2,128], index: 3, kind: output, shape index: {}]
  %s4 = sld [smem:[#allocation0]]
  $region34: #{tpu_custom_call.1} parent=0
    _
  %s6 = ssub.s32 1, %s4
  %s7 = scalar_select 0, %s6, %s4
  $region1: #{tpu_custom_call.1} parent=0
    #allocation2 [shape = 'u8[8192]{0}', space=vmem, size = 0x2000, scoped, tag = 'input window, operand 0, single buffered']
    #allocation3 [shape = 's32[1]{0}', space=sflag, size = 0x4, scoped, tag = 'scoped memory for tpu_custom_call.1']
    #allocation4 [shape = 's32[1]{0}', space=sflag, size = 0x4, scoped, tag = 'scoped memory for tpu_custom_call.1']
    #allocation5 [shape = 'u8[49152]{0}', space=vmem, size = 0xc000, scoped, tag = 'input window, operand 1, single buffered']
    #allocation6 [shape = 's32[1]{0}', space=sflag, size = 0x4, scoped, tag = 'scoped memory for tpu_custom_call.1']
    #allocation7 [shape = 'u8[512]{0}', space=vmem, size = 0x400, scoped, tag = 'input window, operand 2, single buffered']
    #allocation8 [shape = 'u8[1024]{0}', space=vmem, size = 0x400, scoped, tag = 'output window, operand 0, single buffered']
    %8 = vsyncpa [#allocation3], 0
    %9 = vsyncpa [#allocation6], 0
    %10 = vsyncpa [#allocation4], 0
    // Predicated region
    $region2: #{tpu_custom_call.1} parent=1 // pred_check
      _
    $region3: #{tpu_custom_call.1} parent=1 // pred_check_branch
      %12 = sbr.rel (0) target = $region5
    $region4: #{tpu_custom_call.1} parent=1 // pred_region
      %s14 = ssub.s32 256, 256
      %15 = vsyncadd [#allocation3], %s14
      %s16 = sshll.u32 [#allocation2], 4
      %s17 = int_to_ptr.vmem [resolvable:$true] %s16
      %22 = dma.hbm_to_vmem [thread:$0]  %s0, 256, %s17, [#allocation3], 128, 128, 8
    $region5: #{tpu_custom_call.1} parent=1 // pred_fallthru
      _
    // Predicated region
    $region6: #{tpu_custom_call.1} parent=1 // pred_check
      _
    $region7: #{tpu_custom_call.1} parent=1 // pred_check_branch
      %24 = sbr.rel (0) target = $region9
    $region8: #{tpu_custom_call.1} parent=1 // pred_region
      %s26 = ssub.s32 1536, 1536
      %27 = vsyncadd [#allocation6], %s26
      %s28 = sshll.u32 [#allocation5], 4
      %s29 = int_to_ptr.vmem [resolvable:$true] %s28
      %34 = dma.hbm_to_vmem [thread:$0]  %s1, 1536, %s29, [#allocation6], 128, 128, 8
    $region9: #{tpu_custom_call.1} parent=1 // pred_fallthru
      _
    // Predicated region
    $region10: #{tpu_custom_call.1} parent=1 // pred_check
      _
    $region11: #{tpu_custom_call.1} parent=1 // pred_check_branch
      %36 = sbr.rel (0) target = $region13
    $region12: #{tpu_custom_call.1} parent=1 // pred_region
      %s38 = ssub.s32 16, 16
      %39 = vsyncadd [#allocation6], %s38
      %s41 = sshll.u32 [#allocation7], 4
      %s42 = int_to_ptr.vmem [resolvable:$true] %s41
      %44 = dma.hbm_to_vmem [thread:$0]  %s2, 16, %s42, [#allocation6]
    $region13: #{tpu_custom_call.1} parent=1 // pred_fallthru
      _
    // Predicated region
    $region14: #{tpu_custom_call.1} parent=1 // pred_check
      _
    $region15: #{tpu_custom_call.1} parent=1 // pred_check_branch
      %46 = sbr.rel (0) target = $region17
    $region16: #{tpu_custom_call.1} parent=1 // pred_region
      %47 = dma.done [#allocation3], 256
    $region17: #{tpu_custom_call.1} parent=1 // pred_fallthru
      _
    // Predicated region
    $region18: #{tpu_custom_call.1} parent=1 // pred_check
      _
    $region19: #{tpu_custom_call.1} parent=1 // pred_check_branch
      %49 = sbr.rel (0) target = $region21
    $region20: #{tpu_custom_call.1} parent=1 // pred_region
      %50 = dma.done [#allocation6], 1536
    $region21: #{tpu_custom_call.1} parent=1 // pred_fallthru
      _
    // Predicated region
    $region22: #{tpu_custom_call.1} parent=1 // pred_check
      _
    $region23: #{tpu_custom_call.1} parent=1 // pred_check_branch
      %52 = sbr.rel (0) target = $region25
    $region24: #{tpu_custom_call.1} parent=1 // pred_region
      %53 = dma.done [#allocation6], 16
    $region25: #{tpu_custom_call.1} parent=1 // pred_fallthru
      _
    %v54 = vld [vmem:[#allocation2] sm:$0xff]
    %v55 = vld [vmem:[#allocation2 + $0x8] sm:$0xff]
    %v58 = vcombine.high %v54, %v54
    %v59 = vcombine.high %v55, %v55
    %vm62 = vcmask 257024
    %v63 = vsel %vm62, %v54, -inf
    %v64 = vsel %vm62, %v58, -inf
    %v65 = vmax.f32 %v63, %v64
    %v66 = vsel %vm62, %v55, -inf
    %v67 = vsel %vm62, %v59, -inf
    %v68 = vmax.f32 %v66, %v67
    %v69 = vsel %vm62, %v65, 0.0
    %v70 = vrot.slane %v69, 4
    %v71 = vadd.f32 %v69, %v70
    %v72 = vrot.slane %v71, 2
    %v73 = vadd.f32 %v71, %v72
    %v74 = vrot.slane %v73, 1
    %v75 = vadd.f32 %v73, %v74
    %v76 = vsel %vm62, %v68, 0.0
    %v77 = vrot.slane %v76, 4
    %v78 = vadd.f32 %v76, %v77
    %v79 = vrot.slane %v78, 2
    %v80 = vadd.f32 %v78, %v79
    %v81 = vrot.slane %v80, 1
    %v82 = vadd.f32 %v80, %v81
    %v83 = vmul.f32 %v75, 0.25
    %v84 = vmul.f32 %v82, 0.25
    %v87 = vrot.slane %v65, 6
    %v88 = vrot.slane %v87, 4
    %v89 = vrot.slane %v68, 6
    %v90 = vrot.slane %v89, 4
    %v93 = vmax.f32 %v65, %v88
    %v94 = vmax.f32 %v68, %v90
    %vm95 = vcmask 254976
    %v96 = vsel %vm95, %v93, 0.0
    %v97 = vrot.slane %v96, 4
    %v98 = vadd.f32 %v96, %v97
    %v99 = vrot.slane %v98, 2
    %v100 = vadd.f32 %v98, %v99
    %v101 = vrot.slane %v100, 1
    %v102 = vadd.f32 %v100, %v101
    %v103 = vsel %vm95, %v94, 0.0
    %v104 = vrot.slane %v103, 4
    %v105 = vadd.f32 %v103, %v104
    %v106 = vrot.slane %v105, 2
    %v107 = vadd.f32 %v105, %v106
    %v108 = vrot.slane %v107, 1
    %v109 = vadd.f32 %v107, %v108
    %v110 = vmul.f32 %v102, 0.5
    %v111 = vmul.f32 %v109, 0.5
    %v114 = vrot.slane %v93, 5
    %v115 = vrot.slane %v114, 4
    %v116 = vrot.slane %v94, 5
    %v117 = vrot.slane %v116, 4
    %v120 = vmax.f32 %v93, %v115
    %v121 = vmax.f32 %v94, %v117
    %v122 = vadd.f32 %v120, 0.0
    %v123 = vadd.f32 %v121, 0.0
    %v126 = vlaneseq
    %v127 = vshrl.u32 %v126, 7
    %v128 = vsub.s32 0, %v127
    %v129 = vrot.slane %v122, %v128
    %v130 = vlaneseq
    %v131 = vshrl.u32 %v130, 7
    %v132 = vsub.s32 0, %v131
    %v133 = vrot.slane %v123, %v132
    %vm134 = vcmask 1041409
    %v135 = vsel %vm134, %v133, %v129
    %v139 = vsel %vm134, %v111, %v110
    %140 = vrot.lane.b32.xlu0 %v139, 32
    %v141 = vpop.permute.xlu0 %140
    %v145 = vsel %vm134, %v84, %v83
    %146 = vrot.lane.b32.xlu0 %v145, 64
    %v147 = vpop.permute.xlu0 %146
    %vm149 = vcmask 261120
    %v150 = vsel %vm149, %v135, %v141
    %vm151 = vcmask 523264
    %v152 = vsel %vm151, %v150, %v147
    %v153 = vld [vmem:[#allocation5] sm:$0xff]
    %v154 = vld [vmem:[#allocation5 + $0x8] sm:$0xff]
    %v155 = vld [vmem:[#allocation5 + $0x10] sm:$0xff]
    %v156 = vld [vmem:[#allocation5 + $0x18] sm:$0xff]
    %v157 = vld [vmem:[#allocation5 + $0x20] sm:$0xff]
    %v158 = vld [vmem:[#allocation5 + $0x28] sm:$0xff]
    %v159 = vld [vmem:[#allocation5 + $0x30] sm:$0xff]
    %v160 = vld [vmem:[#allocation5 + $0x38] sm:$0xff]
    %v161 = vld [vmem:[#allocation5 + $0x40] sm:$0xff]
    %v162 = vld [vmem:[#allocation5 + $0x48] sm:$0xff]
    %v163 = vld [vmem:[#allocation5 + $0x50] sm:$0xff]
    %v164 = vld [vmem:[#allocation5 + $0x58] sm:$0xff]
    %v165 = vld [vmem:[#allocation7] sm:$0x1]
    %v167 = vlaneseq
    %v168 = vshrl.u32 %v167, 7
    %v169 = vsub.s32 0, %v168
    %v170 = vrot.slane %v165, %v169
    %vm172 = vcmask 785408
    %v174 = vsel %vm172, %v152, 0
    %176 = vmatprep.subr.mxu0 0.0
    %177 = vmatpush1.msra.mxu0 %v153
    %178 = vmatprep.subr.mxu0 0.0
    %179 = vmatpush1.msra.mxu0 %v154
    %180 = vmatprep.subr.mxu0 0.0
    %181 = vmatpush1.msra.mxu0 %v155
    %182 = vmatprep.subr.mxu0 0.0
    %183 = vmatpush1.msra.mxu0 %v156
    %184 = vmatprep.subr.mxu0 0.0
    %185 = vmatpush1.msra.mxu0 %v157
    %186 = vmatprep.subr.mxu0 0.0
    %187 = vmatpush1.msra.mxu0 %v158
    %188 = vmatprep.subr.mxu0 0.0
    %189 = vmatpush1.msra.mxu0 %v159
    %190 = vmatprep.subr.mxu0 0.0
    %191 = vmatpush1.msra.mxu0 %v160
    %192 = vmatprep.subr.mxu0 0.0
    %193 = vmatpush1.msra.mxu0 %v161
    %194 = vmatprep.subr.mxu0 0.0
    %195 = vmatpush1.msra.mxu0 %v162
    %196 = vmatprep.subr.mxu0 0.0
    %197 = vmatpush1.msra.mxu0 %v163
    %198 = vmatprep.subr.mxu0 0.0
    %199 = vmatpush1.msra.mxu0 %v164
    %200 = vmatprep.subr.mxu0 0.0
    %201 = vmatpush1.msra.mxu0 0.0
    %202 = vmatprep.subr.mxu0 0.0
    %203 = vmatpush1.msra.mxu0 0.0
    %204 = vmatprep.subr.mxu0 0.0
    %205 = vmatpush1.msra.mxu0 0.0
    %206 = vmatprep.subr.mxu0 0.0
    %207 = vmatpush1.msra.mxu0 0.0
    %208 = vmatprep.subr.mxu0 0.0
    %209 = vmatpush1.msra.mxu0 0.0
    %210 = vmatprep.subr.mxu0 0.0
    %211 = vmatpush1.msra.mxu0 0.0
    %212 = vmatprep.subr.mxu0 0.0
    %213 = vmatpush1.msra.mxu0 0.0
    %214 = vmatprep.subr.mxu0 0.0
    %215 = vmatpush1.msra.mxu0 0.0
    %216 = vmatprep.subr.mxu0 0.0
    %217 = vmatpush1.msra.mxu0 0.0
    %218 = vmatprep.subr.mxu0 0.0
    %219 = vmatpush1.msra.mxu0 0.0
    %220 = vmatprep.subr.mxu0 0.0
    %221 = vmatpush1.msra.mxu0 0.0
    %222 = vmatprep.subr.mxu0 0.0
    %223 = vmatpush1.msra.mxu0 0.0
    %224 = vmatprep.subr.mxu0 0.0
    %225 = vmatpush1.msra.mxu0 0.0
    %226 = vmatprep.subr.mxu0 0.0
    %227 = vmatpush1.msra.mxu0 0.0
    %228 = vmatprep.subr.mxu0 0.0
    %229 = vmatpush1.msra.mxu0 0.0
    %230 = vmatprep.subr.mxu0 0.0
    %231 = vmatpush1.msra.mxu0 0.0
    %232 = vmatprep.subr.mxu0 0.0
    %233 = vmatpush1.msra.mxu0 0.0
    %234 = vmatprep.subr.mxu0 0.0
    %235 = vmatpush1.msra.mxu0 0.0
    %236 = vmatprep.subr.mxu0 0.0
    %237 = vmatpush1.msra.mxu0 0.0
    %238 = vmatprep.subr.mxu0 0.0
    %239 = vmatpush1.msra.mxu0 0.0
    %240 = vmatprep.mubr.f32.mxu0 0.0
    %241 = vmatmul.mubr.f32.gmra.mrb[0].mxu0 %v174
    %v242 = vpop.f32.mrb[0].mxu0
    %v243 = vadd.f32 %v170, %v242
    %v244 = vpop.f32.mrb[0].mxu0
    %245 = vdwg.mxu0
    %v246 = vxor.u32 %v243, 2147483648
    %v247 = vmul.f32 %v246, 1.442695
    %v248 = vpow.pop %v247
    %v249 = vadd.f32 %v248, 1.0
    %v250 = vrcp.pop %v249
    %v251 = vmul.f32 1.0, %v250
    %252 = vst [vmem:[#allocation8] sm:$0x3] %v251
    // Predicated region
    $region26: #{tpu_custom_call.1} parent=1 // pred_check
      _
    $region27: #{tpu_custom_call.1} parent=1 // pred_check_branch
      %254 = sbr.rel (0) target = $region29
    $region28: #{tpu_custom_call.1} parent=1 // pred_region
      %s256 = ssub.s32 32, 32
      %257 = vsyncadd [#allocation4], %s256
      %s259 = sshll.u32 [#allocation8], 4
      %s260 = int_to_ptr.vmem [resolvable:$true] %s259
      %262 = dma.vmem_to_hbm [thread:$0]  %s260, 32, %s3, [#allocation4]
    $region29: #{tpu_custom_call.1} parent=1 // pred_fallthru
      _
    // Predicated region
    $region30: #{tpu_custom_call.1} parent=1 // pred_check
      _
    $region31: #{tpu_custom_call.1} parent=1 // pred_check_branch
      %264 = sbr.rel (0) target = $region33
    $region32: #{tpu_custom_call.1} parent=1 // pred_region
      %265 = dma.done [#allocation4], 32
    $region33: #{tpu_custom_call.1} parent=1 // pred_fallthru
      _
    %266 = vsyncpa [#allocation3], 1
    %267 = vsyncpa [#allocation6], 1
    %268 = vsyncpa [#allocation4], 1

</llo_original>
